<compile_context>
chip_gen: v5e
topology: v5e:2x2
jax: 0.10.0
libtpu: 0.0.40
codegen_flags: <defaults>
</compile_context>

<pallas_src>
import functools

import jax
import jax.numpy as jnp
from jax import lax
from jax.experimental import pallas as pl
from jax.experimental.pallas import tpu as pltpu

# Large finite negative used for masking.  The PyTorch module uses -inf, which
# NaNs fully-masked rows under the online-softmax recurrence; -1e30 produces
# bit-identical results for any row with >=1 valid position (masked
# probabilities underflow to exactly 0) and stays finite otherwise.
MASK_VALUE = -1e30

# contract the last dim of both operands (q @ k^T without an explicit k.T)
_CONTRACT_LAST = (((1,), (1,)), ((), ()))


def _flash_kernel(*refs, has_bias):
    """Online-softmax attention over one (tq x tk) tile.

    grid = (batch, T tiles, S tiles); the S axis is a reduction carried in
    VMEM scratch (m, l, acc).  o / lse are written on the last S step.
    """
    if has_bias:
        q_ref, k_ref, v_ref, b_ref, o_ref, lse_ref, m_sc, l_sc, acc_sc = refs
    else:
        q_ref, k_ref, v_ref, o_ref, lse_ref, m_sc, l_sc, acc_sc = refs
        b_ref = None

    j = pl.program_id(2)

    @pl.when(j == 0)
    def _init():
        m_sc[...] = jnp.full(m_sc.shape, MASK_VALUE, dtype=m_sc.dtype)
        l_sc[...] = jnp.zeros(l_sc.shape, l_sc.dtype)
        acc_sc[...] = jnp.zeros(acc_sc.shape, acc_sc.dtype)

    # Q already carries the 1/sqrt(H) scale (folded in the wrapper cast).
    s = lax.dot_general(q_ref[...], k_ref[...], _CONTRACT_LAST,
                        preferred_element_type=jnp.float32)          # (tq, tk)
    if has_bias:
        s = s + b_ref[...]                                            # (1,tk) bcast

    m_prev = m_sc[...]                                                # (tq, 1)
    m_new = jnp.maximum(m_prev, jnp.max(s, axis=-1, keepdims=True))
    alpha = jnp.exp(m_prev - m_new)
    p = jnp.exp(s - m_new)                                            # (tq, tk)

    l_sc[...] = alpha * l_sc[...] + jnp.sum(p, axis=-1, keepdims=True)
    acc_sc[...] = alpha * acc_sc[...] + jnp.dot(
        p.astype(v_ref.dtype), v_ref[...], preferred_element_type=jnp.float32)
    m_sc[...] = m_new

    @pl.when(j == pl.num_programs(2) - 1)
    def _finalize():
        l = l_sc[...]
        inv = pl.reciprocal(l, approx=True)        # EUP slot, frees the VALU
        inv = inv * (2.0 - l * inv)                # one Newton step -> ~f32 acc
        o_ref[...] = (acc_sc[...] * inv).astype(o_ref.dtype)
        lse_ref[...] = m_sc[...] + jnp.log(l)


def _probs_kernel(*refs, has_bias):
    """Normalized attention probabilities for one (tq x tk) tile, using the
    log-sum-exp from the flash pass (no division, no softmax re-reduction)."""
    if has_bias:
        q_ref, k_ref, b_ref, lse_ref, p_ref = refs
    else:
        q_ref, k_ref, lse_ref, p_ref = refs
        b_ref = None

    s = lax.dot_general(q_ref[...], k_ref[...], _CONTRACT_LAST,
                        preferred_element_type=jnp.float32)
    if has_bias:
        s = s + b_ref[...]
    p_ref[...] = jnp.exp(s - lse_ref[...]).astype(p_ref.dtype)


def _round_up(x, m):
    return ((x + m - 1) // m) * m


def _cdiv(a, b):
    return -(-a // b)


def attention(query, keys, values=None, mask=None, *,
              tq=512, tk=1024, return_probs=True,
              mxu_dtype=jnp.bfloat16, probs_dtype=None):
    """Pallas attention; returns (o_attn, p_attn) like Attention.forward.

    mxu_dtype:   dtype Q/K/V are cast to for the MXU matmuls (bf16 by default;
                 pass None to keep the input dtype / full f32 precision).
    probs_dtype: dtype of the returned p_attn (defaults to query.dtype; pass
                 jnp.bfloat16 to halve the p_attn HBM write traffic).
    """
    if values is None:
        values = keys
    B, T, H = query.shape
    _, S, _ = keys.shape

    scale = 1.0 / float(H) ** 0.5
    if mxu_dtype is None:
        mxu_dtype = query.dtype
    out_dtype = query.dtype
    probs_dtype = probs_dtype if probs_dtype is not None else query.dtype

    # -------- pad to MXU / lane-friendly shapes ---------------------------
    Hp = _round_up(H, 128)                      # lane-dense H, >=128 contraction
    tq = min(tq, _round_up(T, 16))              # 16 sublanes (bf16 packs 2/row)
    tk = min(tk, _round_up(S, 128))             # lane-aligned S tile
    # v7x megacore: make sure both TensorCores get a grid point when possible.
    if B * _cdiv(T, tq) < 2 and T > 16:
        tq = _round_up(_cdiv(T, 2), 16)
    Tp = _round_up(T, tq)
    Sp = _round_up(S, tk)
    nT, nS = Tp // tq, Sp // tk

    # Fold the 1/sqrt(H) scale into the one-time f32 -> mxu_dtype cast of Q.
    qs = (query.astype(jnp.float32) * scale).astype(mxu_dtype)
    qp = jnp.pad(qs, ((0, 0), (0, Tp - T), (0, Hp - H)))
    kp = jnp.pad(keys.astype(mxu_dtype), ((0, 0), (0, Sp - S), (0, Hp - H)))
    vp = jnp.pad(values.astype(mxu_dtype), ((0, 0), (0, Sp - S), (0, Hp - H)))

    # Additive f32 bias (0 / -1e30); only materialized when actually needed.
    has_bias = (mask is not None) or (Sp != S)
    if has_bias:
        if mask is None:
            valid = jnp.ones((B, 1, S), dtype=jnp.bool_)
        else:
            valid = (mask.reshape(B, 1, S) != 0)
        valid = jnp.pad(valid, ((0, 0), (0, 0), (0, Sp - S)),
                        constant_values=False)            # padded cols invalid
        bias = jnp.where(valid, 0.0, MASK_VALUE).astype(jnp.float32)

    BATCH = pl.Squeezed()                       # kernel sees 2-D refs

    q_spec = pl.BlockSpec((BATCH, tq, Hp), lambda b, i, j: (b, i, 0))
    k_spec = pl.BlockSpec((BATCH, tk, Hp), lambda b, i, j: (b, j, 0))
    b_spec = pl.BlockSpec((BATCH, 1, tk), lambda b, i, j: (b, 0, j))
    o_spec = pl.BlockSpec((BATCH, tq, Hp), lambda b, i, j: (b, i, 0))
    lse_spec = pl.BlockSpec((BATCH, tq, 1), lambda b, i, j: (b, i, 0))
    # NOTE: if K/V DMA is still exposed after the bf16 halving (wall >> compute),
    # add pipeline_mode=pl.Buffered(3) to k_spec; default double-buffering is
    # usually enough once the per-step bytes are halved.

    flash_in_specs = [q_spec, k_spec, k_spec] + ([b_spec] if has_bias else [])
    flash_inputs = (qp, kp, vp) + ((bias,) if has_bias else ())

    flash = pl.pallas_call(
        functools.partial(_flash_kernel, has_bias=has_bias),
        out_shape=(jax.ShapeDtypeStruct((B, Tp, Hp), out_dtype),
                   jax.ShapeDtypeStruct((B, Tp, 1), jnp.float32)),
        grid_spec=pltpu.PrefetchScalarGridSpec(
            num_scalar_prefetch=0,
            grid=(B, nT, nS),
            in_specs=flash_in_specs,
            out_specs=[o_spec, lse_spec],
            scratch_shapes=[pltpu.VMEM((tq, 1), jnp.float32),
                            pltpu.VMEM((tq, 1), jnp.float32),
                            pltpu.VMEM((tq, Hp), jnp.float32)]),
        compiler_params=pltpu.CompilerParams(
            dimension_semantics=("parallel", "parallel", "arbitrary"),
            vmem_limit_bytes=32 * 1024 * 1024),
    )
    o_pad, lse = flash(*flash_inputs)
    o_attn = o_pad[:, :T, :H]

    if not return_probs:
        return o_attn, None

    p_spec = pl.BlockSpec((BATCH, tq, tk), lambda b, i, j: (b, i, j))
    probs_in_specs = ([q_spec, k_spec] + ([b_spec] if has_bias else [])
                      + [lse_spec])
    probs_inputs = (qp, kp) + ((bias,) if has_bias else ()) + (lse,)

    probs = pl.pallas_call(
        functools.partial(_probs_kernel, has_bias=has_bias),
        out_shape=jax.ShapeDtypeStruct((B, Tp, Sp), probs_dtype),
        grid_spec=pltpu.PrefetchScalarGridSpec(
            num_scalar_prefetch=0,
            grid=(B, nT, nS),
            in_specs=probs_in_specs,
            out_specs=p_spec),
        compiler_params=pltpu.CompilerParams(
            dimension_semantics=("parallel", "parallel", "parallel"),
            vmem_limit_bytes=32 * 1024 * 1024),
    )
    p_attn = probs(*probs_inputs)[:, :T, :S]
    return o_attn, p_attn


def _reference(query, keys, values, mask):
    H = query.shape[-1]
    scores = jnp.einsum("bth,bsh->bts", query, keys) / jnp.sqrt(jnp.float32(H))
    scores = jnp.where(mask.reshape(mask.shape[0], 1, -1) == 0, -jnp.inf, scores)
    p = jax.nn.softmax(scores, axis=-1)
    o = jnp.einsum("bts,bsh->bth", p, values)
    return o, p


if __name__ == "__main__":
    key = jax.random.PRNGKey(0)
    B, T, S, H = 2, 8, 8, 32
    kq, kk, kv = jax.random.split(key, 3)
    query = jax.random.normal(kq, (B, T, H), dtype=jnp.float32)
    keys = jax.random.normal(kk, (B, S, H), dtype=jnp.float32)
    values = jax.random.normal(kv, (B, S, H), dtype=jnp.float32)
    # mask out the last source position of batch 1
    mask = jnp.ones((B, S), dtype=jnp.int32).at[1, -1].set(0)

    o_attn, p_attn = attention(query, keys, values, mask)
    jax.block_until_ready((o_attn, p_attn))

    o_ref, p_ref = _reference(query, keys, values, mask)
    assert o_attn.shape == (B, T, H) and p_attn.shape == (B, T, S)
    # bf16 MXU path -> compare with a tolerance appropriate for bf16 matmuls
    assert jnp.allclose(o_attn, o_ref, atol=2e-2, rtol=2e-2)
    assert jnp.allclose(p_attn, p_ref, atol=2e-2, rtol=2e-2)
    assert jnp.allclose(jnp.sum(p_attn, axis=-1), 1.0, atol=1e-3)
    assert float(jnp.max(p_attn[1, :, -1])) < 1e-6   # masked position -> 0 prob

    # also exercise the no-mask / no-probs fast path
    o_only, p_none = attention(query, keys, values, None, return_probs=False)
    jax.block_until_ready(o_only)
    assert p_none is None and o_only.shape == (B, T, H)

    print("KERNEL_OK")
</pallas_src>

<mosaic_0001>
module attributes {stable_mosaic.version = 11 : i64} {
  func.func @_flash_kernel(%arg0: i32, %arg1: i32, %arg2: i32, %arg3: memref<1x16x128xbf16, #tpu.memory_space<vmem>>, %arg4: memref<1x128x128xbf16, #tpu.memory_space<vmem>>, %arg5: memref<1x128x128xbf16, #tpu.memory_space<vmem>>, %arg6: memref<1x1x128xf32, #tpu.memory_space<vmem>>, %arg7: memref<1x16x128xf32, #tpu.memory_space<vmem>>, %arg8: memref<1x16x1xf32, #tpu.memory_space<vmem>>, %arg9: memref<16x1xf32, #tpu.memory_space<vmem>>, %arg10: memref<16x1xf32, #tpu.memory_space<vmem>>, %arg11: memref<16x128xf32, #tpu.memory_space<vmem>>) attributes {dimension_semantics = [#tpu.dimension_semantics<parallel>, #tpu.dimension_semantics<parallel>, #tpu.dimension_semantics<arbitrary>], iteration_bounds = array<i64: 2, 1, 1>, scalar_prefetch = 0 : i64, scratch_operands = 3 : i64, tpu.core_type = #tpu.core_type<tc>, window_params = [{transform_indices = @transform_0, window_bounds = array<i64: 1, 16, 128>}, {transform_indices = @transform_1, window_bounds = array<i64: 1, 128, 128>}, {transform_indices = @transform_2, window_bounds = array<i64: 1, 128, 128>}, {transform_indices = @transform_3, window_bounds = array<i64: 1, 1, 128>}, {transform_indices = @transform_4, window_bounds = array<i64: 1, 16, 128>}, {transform_indices = @transform_5, window_bounds = array<i64: 1, 16, 1>}]} {
    %c0_i32 = arith.constant 0 : i32
    %0 = arith.cmpi eq, %arg2, %c0_i32 : i32
    %1 = arith.extui %0 : i1 to i32
    %c0_i32_0 = arith.constant 0 : i32
    %2 = arith.cmpi ne, %1, %c0_i32_0 : i32
    scf.if %2 {
      %cst_29 = arith.constant -1.000000e+30 : f32
      %40 = vector.broadcast %cst_29 : f32 to vector<16x1xf32>
      %c0_30 = arith.constant 0 : index
      %c0_31 = arith.constant 0 : index
      %41 = vector.load %arg9[%c0_30, %c0_31] : memref<16x1xf32, #tpu.memory_space<vmem>>, vector<16x1xf32>
      tpu.vector_store %arg9[%c0_30, %c0_31], %40 {strides = array<i32>} : memref<16x1xf32, #tpu.memory_space<vmem>>, vector<16x1xf32>,
      %cst_32 = arith.constant 0.000000e+00 : f32
      %42 = vector.broadcast %cst_32 : f32 to vector<16x1xf32>
      %c0_33 = arith.constant 0 : index
      %c0_34 = arith.constant 0 : index
      %43 = vector.load %arg10[%c0_33, %c0_34] : memref<16x1xf32, #tpu.memory_space<vmem>>, vector<16x1xf32>
      tpu.vector_store %arg10[%c0_33, %c0_34], %42 {strides = array<i32>} : memref<16x1xf32, #tpu.memory_space<vmem>>, vector<16x1xf32>,
      %cst_35 = arith.constant 0.000000e+00 : f32
      %44 = vector.broadcast %cst_35 : f32 to vector<16x128xf32>
      %c0_36 = arith.constant 0 : index
      %c0_37 = arith.constant 0 : index
      %45 = vector.load %arg11[%c0_36, %c0_37] : memref<16x128xf32, #tpu.memory_space<vmem>>, vector<16x128xf32>
      tpu.vector_store %arg11[%c0_36, %c0_37], %44 {strides = array<i32>} : memref<16x128xf32, #tpu.memory_space<vmem>>, vector<16x128xf32>,
    } else {
    }
    %c0 = arith.constant 0 : index
    %c0_1 = arith.constant 0 : index
    %c0_2 = arith.constant 0 : index
    %3 = vector.load %arg3[%c0, %c0_1, %c0_2] : memref<1x16x128xbf16, #tpu.memory_space<vmem>>, vector<1x16x128xbf16>
    %4 = vector.shape_cast %3 : vector<1x16x128xbf16> to vector<16x128xbf16>
    %c0_3 = arith.constant 0 : index
    %c0_4 = arith.constant 0 : index
    %c0_5 = arith.constant 0 : index
    %5 = vector.load %arg4[%c0_3, %c0_4, %c0_5] : memref<1x128x128xbf16, #tpu.memory_space<vmem>>, vector<1x128x128xbf16>
    %6 = vector.shape_cast %5 : vector<1x128x128xbf16> to vector<128x128xbf16>
    %cst = arith.constant dense<0.000000e+00> : vector<16x128xf32>
    %7 = tpu.matmul %4, %6, %cst {dimension_numbers = #tpu.dot_dimension_numbers<[1], [1], [0], [0], [0, 0, 1, 0], [], []>} : vector<16x128xbf16>, vector<128x128xbf16>, vector<16x128xf32> -> vector<16x128xf32>
    %c0_6 = arith.constant 0 : index
    %c0_7 = arith.constant 0 : index
    %c0_8 = arith.constant 0 : index
    %8 = vector.load %arg6[%c0_6, %c0_7, %c0_8] : memref<1x1x128xf32, #tpu.memory_space<vmem>>, vector<1x1x128xf32>
    %9 = vector.shape_cast %8 : vector<1x1x128xf32> to vector<1x128xf32>
    %10 = vector.broadcast %9 : vector<1x128xf32> to vector<16x128xf32>
    %11 = arith.addf %7, %10 : vector<16x128xf32>
    %c0_9 = arith.constant 0 : index
    %c0_10 = arith.constant 0 : index
    %12 = vector.load %arg9[%c0_9, %c0_10] : memref<16x1xf32, #tpu.memory_space<vmem>>, vector<16x1xf32>
    %cst_11 = arith.constant dense<0xFF800000> : vector<16xf32>
    %13 = vector.multi_reduction <maximumf>, %11, %cst_11 [1] : vector<16x128xf32> to vector<16xf32>
    %14 = vector.shape_cast %13 : vector<16xf32> to vector<16x1xf32>
    %15 = arith.maximumf %12, %14 : vector<16x1xf32>
    %16 = arith.subf %12, %15 : vector<16x1xf32>
    %17 = math.exp %16 : vector<16x1xf32>
    %18 = vector.broadcast %15 : vector<16x1xf32> to vector<16x128xf32>
    %19 = arith.subf %11, %18 : vector<16x128xf32>
    %20 = math.exp %19 : vector<16x128xf32>
    %c0_12 = arith.constant 0 : index
    %c0_13 = arith.constant 0 : index
    %21 = vector.load %arg10[%c0_12, %c0_13] : memref<16x1xf32, #tpu.memory_space<vmem>>, vector<16x1xf32>
    %22 = arith.mulf %17, %21 : vector<16x1xf32>
    %cst_14 = arith.constant dense<0.000000e+00> : vector<16xf32>
    %23 = vector.multi_reduction <add>, %20, %cst_14 [1] : vector<16x128xf32> to vector<16xf32>
    %24 = vector.shape_cast %23 : vector<16xf32> to vector<16x1xf32>
    %25 = arith.addf %22, %24 : vector<16x1xf32>
    %c0_15 = arith.constant 0 : index
    %c0_16 = arith.constant 0 : index
    %26 = vector.load %arg10[%c0_15, %c0_16] : memref<16x1xf32, #tpu.memory_space<vmem>>, vector<16x1xf32>
    tpu.vector_store %arg10[%c0_15, %c0_16], %25 {strides = array<i32>} : memref<16x1xf32, #tpu.memory_space<vmem>>, vector<16x1xf32>,
    %c0_17 = arith.constant 0 : index
    %c0_18 = arith.constant 0 : index
    %27 = vector.load %arg11[%c0_17, %c0_18] : memref<16x128xf32, #tpu.memory_space<vmem>>, vector<16x128xf32>
    %28 = vector.broadcast %17 : vector<16x1xf32> to vector<16x128xf32>
    %29 = arith.mulf %28, %27 : vector<16x128xf32>
    %30 = arith.truncf %20 : vector<16x128xf32> to vector<16x128xbf16>
    %c0_19 = arith.constant 0 : index
    %c0_20 = arith.constant 0 : index
    %c0_21 = arith.constant 0 : index
    %31 = vector.load %arg5[%c0_19, %c0_20, %c0_21] : memref<1x128x128xbf16, #tpu.memory_space<vmem>>, vector<1x128x128xbf16>
    %32 = vector.shape_cast %31 : vector<1x128x128xbf16> to vector<128x128xbf16>
    %cst_22 = arith.constant dense<0.000000e+00> : vector<16x128xf32>
    %33 = tpu.matmul %30, %32, %cst_22 {dimension_numbers = #tpu.dot_dimension_numbers<[1], [0], [0], [1], [0, 0, 1, 1], [], []>} : vector<16x128xbf16>, vector<128x128xbf16>, vector<16x128xf32> -> vector<16x128xf32>
    %34 = arith.addf %29, %33 : vector<16x128xf32>
    %c0_23 = arith.constant 0 : index
    %c0_24 = arith.constant 0 : index
    %35 = vector.load %arg11[%c0_23, %c0_24] : memref<16x128xf32, #tpu.memory_space<vmem>>, vector<16x128xf32>
    tpu.vector_store %arg11[%c0_23, %c0_24], %34 {strides = array<i32>} : memref<16x128xf32, #tpu.memory_space<vmem>>, vector<16x128xf32>,
    %c0_25 = arith.constant 0 : index
    %c0_26 = arith.constant 0 : index
    %36 = vector.load %arg9[%c0_25, %c0_26] : memref<16x1xf32, #tpu.memory_space<vmem>>, vector<16x1xf32>
    tpu.vector_store %arg9[%c0_25, %c0_26], %15 {strides = array<i32>} : memref<16x1xf32, #tpu.memory_space<vmem>>, vector<16x1xf32>,
    %c0_i32_27 = arith.constant 0 : i32
    %37 = arith.cmpi eq, %arg2, %c0_i32_27 : i32
    %38 = arith.extui %37 : i1 to i32
    %c0_i32_28 = arith.constant 0 : i32
    %39 = arith.cmpi ne, %38, %c0_i32_28 : i32
    scf.if %39 {
      %c0_29 = arith.constant 0 : index
      %c0_30 = arith.constant 0 : index
      %40 = vector.load %arg10[%c0_29, %c0_30] : memref<16x1xf32, #tpu.memory_space<vmem>>, vector<16x1xf32>
      %41 = tpu.reciprocal %40 {approx = true} : vector<16x1xf32> -> vector<16x1xf32>
      %42 = arith.mulf %40, %41 : vector<16x1xf32>
      %cst_31 = arith.constant 2.000000e+00 : f32
      %43 = vector.broadcast %cst_31 : f32 to vector<16x1xf32>
      %44 = arith.subf %43, %42 : vector<16x1xf32>
      %45 = arith.mulf %41, %44 : vector<16x1xf32>
      %c0_32 = arith.constant 0 : index
      %c0_33 = arith.constant 0 : index
      %46 = vector.load %arg11[%c0_32, %c0_33] : memref<16x128xf32, #tpu.memory_space<vmem>>, vector<16x128xf32>
      %47 = vector.broadcast %45 : vector<16x1xf32> to vector<16x128xf32>
      %48 = arith.mulf %46, %47 : vector<16x128xf32>
      %c0_34 = arith.constant 0 : index
      %c0_35 = arith.constant 0 : index
      %c0_36 = arith.constant 0 : index
      %49 = vector.load %arg7[%c0_34, %c0_35, %c0_36] : memref<1x16x128xf32, #tpu.memory_space<vmem>>, vector<1x16x128xf32>
      %50 = vector.shape_cast %49 : vector<1x16x128xf32> to vector<16x128xf32>
      %51 = vector.shape_cast %48 : vector<16x128xf32> to vector<1x16x128xf32>
      tpu.vector_store %arg7[%c0_34, %c0_35, %c0_36], %51 {strides = array<i32>} : memref<1x16x128xf32, #tpu.memory_space<vmem>>, vector<1x16x128xf32>,
      %c0_37 = arith.constant 0 : index
      %c0_38 = arith.constant 0 : index
      %52 = vector.load %arg9[%c0_37, %c0_38] : memref<16x1xf32, #tpu.memory_space<vmem>>, vector<16x1xf32>
      %53 = math.log %40 : vector<16x1xf32>
      %54 = arith.addf %52, %53 : vector<16x1xf32>
      %c0_39 = arith.constant 0 : index
      %c0_40 = arith.constant 0 : index
      %c0_41 = arith.constant 0 : index
      %55 = vector.load %arg8[%c0_39, %c0_40, %c0_41] : memref<1x16x1xf32, #tpu.memory_space<vmem>>, vector<1x16x1xf32>
      %56 = vector.shape_cast %55 : vector<1x16x1xf32> to vector<16x1xf32>
      %57 = vector.shape_cast %54 : vector<16x1xf32> to vector<1x16x1xf32>
      tpu.vector_store %arg8[%c0_39, %c0_40, %c0_41], %57 {strides = array<i32>} : memref<1x16x1xf32, #tpu.memory_space<vmem>>, vector<1x16x1xf32>,
    } else {
    }
    return
  }
  func.func @transform_0(%arg0: i32, %arg1: i32, %arg2: i32) -> (i32, i32, i32) {
    %c0_i32 = arith.constant 0 : i32
    %c0_i32_0 = arith.constant 0 : i32
    return %arg0, %arg1, %c0_i32 : i32, i32, i32
  }
  func.func @transform_1(%arg0: i32, %arg1: i32, %arg2: i32) -> (i32, i32, i32) {
    %c0_i32 = arith.constant 0 : i32
    %c0_i32_0 = arith.constant 0 : i32
    return %arg0, %arg2, %c0_i32 : i32, i32, i32
  }
  func.func @transform_2(%arg0: i32, %arg1: i32, %arg2: i32) -> (i32, i32, i32) {
    %c0_i32 = arith.constant 0 : i32
    %c0_i32_0 = arith.constant 0 : i32
    return %arg0, %arg2, %c0_i32 : i32, i32, i32
  }
  func.func @transform_3(%arg0: i32, %arg1: i32, %arg2: i32) -> (i32, i32, i32) {
    %c0_i32 = arith.constant 0 : i32
    %c0_i32_0 = arith.constant 0 : i32
    return %arg0, %c0_i32, %arg2 : i32, i32, i32
  }
  func.func @transform_4(%arg0: i32, %arg1: i32, %arg2: i32) -> (i32, i32, i32) {
    %c0_i32 = arith.constant 0 : i32
    %c0_i32_0 = arith.constant 0 : i32
    return %arg0, %arg1, %c0_i32 : i32, i32, i32
  }
  func.func @transform_5(%arg0: i32, %arg1: i32, %arg2: i32) -> (i32, i32, i32) {
    %c0_i32 = arith.constant 0 : i32
    %c0_i32_0 = arith.constant 0 : i32
    return %arg0, %arg1, %c0_i32 : i32, i32, i32
  }
}

</mosaic_0001>

<llo_original>
// kernel: tpu_custom_call.1
$region0: #{tpu_custom_call.1}
  #allocation0 [shape = 'u32[]', space=smem, size = 0x4, offset = 0x4, fixed_abs, tag = 'smem constant byte address 0x4 - core index']
  #allocation1 [shape = 'u32[72,128]{1,0:T(1,128)}', space=vmem, size = 0x9000, scoped, tag = 'internal scratch']
  #allocation2 [shape = 'f32[16,1]{1,0:T(8,128)}', space=vmem, size = 0x2000, scoped, tag = 'scratch operand']
  #allocation3 [shape = 'f32[16,1]{1,0:T(8,128)}', space=vmem, size = 0x2000, scoped, tag = 'scratch operand']
  #allocation4 [shape = 'f32[16,128]{1,0:T(8,128)}', space=vmem, size = 0x2000, scoped, tag = 'scratch operand']
  %s0 = inlined_call_operand.hbm [shape: bf16[2,16,128], index: 0, kind: input, shape index: {}]
  %s1 = inlined_call_operand.hbm [shape: bf16[2,128,128], index: 1, kind: input, shape index: {}]
  %s2 = inlined_call_operand.hbm [shape: bf16[2,128,128], index: 2, kind: input, shape index: {}]
  %s3 = inlined_call_operand.vmem [shape: f32[2,1,128], index: 3, kind: input, shape index: {}]
  %s4 = inlined_call_operand.hbm [shape: f32[2,16,128], index: 4, kind: output, shape index: {0}]
  %s5 = inlined_call_operand.vmem [shape: f32[2,16,1], index: 5, kind: output, shape index: {1}]
  %6 = xla_tuple %s4, %s5
  %s7 = sld [smem:[#allocation0]]
  $region77: #{tpu_custom_call.1} parent=0
    _
  %s9 = ssub.s32 1, %s7
  %s10 = scalar_select 0, %s9, %s7
  $region1: #{tpu_custom_call.1} parent=0
    #allocation5 [shape = 'u8[8192]{0}', space=vmem, size = 0x2000, scoped, tag = 'input window, operand 0']
    #allocation6 [shape = 's32[2]{0}', space=sflag, size = 0x8, scoped, tag = 'scoped memory for tpu_custom_call.1']
    #allocation7 [shape = 's32[2]{0}', space=sflag, size = 0x8, scoped, tag = 'scoped memory for tpu_custom_call.1']
    #allocation8 [shape = 'u8[65536]{0}', space=vmem, size = 0x10000, scoped, tag = 'input window, operand 1']
    #allocation9 [shape = 's32[2]{0}', space=sflag, size = 0x8, scoped, tag = 'scoped memory for tpu_custom_call.1']
    #allocation10 [shape = 'u8[65536]{0}', space=vmem, size = 0x10000, scoped, tag = 'input window, operand 2']
    #allocation11 [shape = 'u8[16384]{0}', space=vmem, size = 0x4000, scoped, tag = 'output window, operand 0']
    %11 = vsyncpa [#allocation6], 0
    %s12 = scalar_lea.sflag [#allocation6], 1
    %13 = vsyncpa %s12, 0
    %14 = vsyncpa [#allocation9], 0
    %s15 = scalar_lea.sflag [#allocation9], 1
    %16 = vsyncpa %s15, 0
    %17 = vsyncpa [#allocation7], 0
    %s18 = scalar_lea.sflag [#allocation7], 1
    %19 = vsyncpa %s18, 0
    loop: start=0, step=1, limit=4
    $region2: #{tpu_custom_call.1} parent=1 // loop_pre_header
      _
    $region3: #{tpu_custom_call.1} parent=1 // loop_header
      %s21 = sphi 0, %s25
      %p22 = scmp.ge.s32.totalorder %s21, 4
      %s28 = sphi 0, %s47
      %s29 = sphi 0, %s43
      %s30 = sphi 0, %s39
      %s31 = sphi 0, %s28
      %s32 = sphi 0, %s29
      %s33 = sphi 0, %s30
      %s34 = sphi 0, %s31
      %s35 = sphi 0, %s32
      %s36 = sphi 0, %s33
      %s52 = sphi 0, %s54
      %s55 = sphi 0, %s52
      %s56 = sphi 0, %s55
      %s72 = sphi 0, %s56
      %s80 = sphi 0, %s82
      %s83 = sphi 0, %s80
      %s84 = sphi 0, %s83
      %s100 = sphi 0, %s84
      %s108 = sphi 0, %s110
      %s111 = sphi 0, %s108
      %s112 = sphi 0, %s111
      %s128 = sphi 0, %s112
      %s136 = sphi 0, %s138
      %s139 = sphi 0, %s136
      %s140 = sphi 0, %s139
      %s156 = sphi 0, %s140
      %s164 = sphi 0, %s166
      %s167 = sphi 0, %s164
      %s168 = sphi 0, %s167
      %s184 = sphi 0, %s168
      %s192 = sphi 0, %s194
      %s195 = sphi 0, %s192
      %s196 = sphi 0, %s195
      %s212 = sphi 0, %s196
    $region4: #{tpu_custom_call.1} parent=1 // loop_header_branch
      %24 = sbr.rel (%p22) target = $region8
    $region5: #{tpu_custom_call.1} parent=1 // loop_body
      %s26 = ssub.s32 %s21, 1
      %s27 = ssub.s32 %s21, 2
      %s37 = sadd.s32 1, %s30
      %p38 = scmp.ge.s32.totalorder %s37, 1
      %s39 = scalar_select %p38, 0, %s37
      %s40 = sadd.s32 1, %s29
      %s41 = scalar_select %p38, %s40, %s29
      %p42 = scmp.ge.s32.totalorder %s41, 1
      %s43 = scalar_select %p42, 0, %s41
      %s44 = sadd.s32 1, %s28
      %s45 = scalar_select %p42, %s44, %s28
      %p46 = scmp.ge.s32.totalorder %s45, 2
      %s47 = scalar_select %p46, 0, %s45
      %s48 = ssub.s32 %s28, %s47
      %s49 = ssub.s32 %s29, %s43
      %s50 = sor.u32 %s48, %s49
      %p51 = scmp.eq.s32.totalorder %s50, 0
      %s53 = sadd.s32 %s52, 1
      %s54 = scalar_select %p51, %s52, %s53
      %p57 = pneg %p51
      %p58 = scmp.eq.s32.totalorder %s21, 1
      %p59 = por %p57, %p58
      %p60 = scmp.ne.s32.totalorder %s52, %s55
      %p61 = scmp.eq.s32.totalorder %s21, 0
      %p62 = por %p60, %p61
      %p63 = scmp.ne.s32.totalorder %s52, %s55
      %p64 = scmp.eq.s32.totalorder %s26, 1
      %p65 = por %p63, %p64
      %p66 = scmp.ne.s32.totalorder %s55, %s56
      %p67 = scmp.eq.s32.totalorder %s26, 0
      %p68 = por %p66, %p67
      %p69 = scmp.ne.s32.totalorder %s55, %s56
      %p70 = scmp.eq.s32.totalorder %s27, 1
      %p71 = por %p69, %p70
      %p73 = scmp.ne.s32.totalorder %s56, %s72
      %p74 = scmp.eq.s32.totalorder %s27, 0
      %p75 = por %p73, %p74
      %s76 = ssub.s32 %s28, %s47
      %s77 = ssub.s32 %s30, %s39
      %s78 = sor.u32 %s76, %s77
      %p79 = scmp.eq.s32.totalorder %s78, 0
      %s81 = sadd.s32 %s80, 1
      %s82 = scalar_select %p79, %s80, %s81
      %p85 = pneg %p79
      %p86 = scmp.eq.s32.totalorder %s21, 1
      %p87 = por %p85, %p86
      %p88 = scmp.ne.s32.totalorder %s80, %s83
      %p89 = scmp.eq.s32.totalorder %s21, 0
      %p90 = por %p88, %p89
      %p91 = scmp.ne.s32.totalorder %s80, %s83
      %p92 = scmp.eq.s32.totalorder %s26, 1
      %p93 = por %p91, %p92
      %p94 = scmp.ne.s32.totalorder %s83, %s84
      %p95 = scmp.eq.s32.totalorder %s26, 0
      %p96 = por %p94, %p95
      %p97 = scmp.ne.s32.totalorder %s83, %s84
      %p98 = scmp.eq.s32.totalorder %s27, 1
      %p99 = por %p97, %p98
      %p101 = scmp.ne.s32.totalorder %s84, %s100
      %p102 = scmp.eq.s32.totalorder %s27, 0
      %p103 = por %p101, %p102
      %s104 = ssub.s32 %s28, %s47
      %s105 = ssub.s32 %s30, %s39
      %s106 = sor.u32 %s104, %s105
      %p107 = scmp.eq.s32.totalorder %s106, 0
      %s109 = sadd.s32 %s108, 1
      %s110 = scalar_select %p107, %s108, %s109
      %p113 = pneg %p107
      %p114 = scmp.eq.s32.totalorder %s21, 1
      %p115 = por %p113, %p114
      %p116 = scmp.ne.s32.totalorder %s108, %s111
      %p117 = scmp.eq.s32.totalorder %s21, 0
      %p118 = por %p116, %p117
      %p119 = scmp.ne.s32.totalorder %s108, %s111
      %p120 = scmp.eq.s32.totalorder %s26, 1
      %p121 = por %p119, %p120
      %p122 = scmp.ne.s32.totalorder %s111, %s112
      %p123 = scmp.eq.s32.totalorder %s26, 0
      %p124 = por %p122, %p123
      %p125 = scmp.ne.s32.totalorder %s111, %s112
      %p126 = scmp.eq.s32.totalorder %s27, 1
      %p127 = por %p125, %p126
      %p129 = scmp.ne.s32.totalorder %s112, %s128
      %p130 = scmp.eq.s32.totalorder %s27, 0
      %p131 = por %p129, %p130
      %s132 = ssub.s32 %s28, %s47
      %s133 = ssub.s32 %s30, %s39
      %s134 = sor.u32 %s132, %s133
      %p135 = scmp.eq.s32.totalorder %s134, 0
      %s137 = sadd.s32 %s136, 1
      %s138 = scalar_select %p135, %s136, %s137
      %p141 = pneg %p135
      %p142 = scmp.eq.s32.totalorder %s21, 1
      %p143 = por %p141, %p142
      %p144 = scmp.ne.s32.totalorder %s136, %s139
      %p145 = scmp.eq.s32.totalorder %s21, 0
      %p146 = por %p144, %p145
      %p147 = scmp.ne.s32.totalorder %s136, %s139
      %p148 = scmp.eq.s32.totalorder %s26, 1
      %p149 = por %p147, %p148
      %p150 = scmp.ne.s32.totalorder %s139, %s140
      %p151 = scmp.eq.s32.totalorder %s26, 0
      %p152 = por %p150, %p151
      %p153 = scmp.ne.s32.totalorder %s139, %s140
      %p154 = scmp.eq.s32.totalorder %s27, 1
      %p155 = por %p153, %p154
      %p157 = scmp.ne.s32.totalorder %s140, %s156
      %p158 = scmp.eq.s32.totalorder %s27, 0
      %p159 = por %p157, %p158
      %s160 = ssub.s32 %s28, %s47
      %s161 = ssub.s32 %s29, %s43
      %s162 = sor.u32 %s160, %s161
      %p163 = scmp.eq.s32.totalorder %s162, 0
      %s165 = sadd.s32 %s164, 1
      %s166 = scalar_select %p163, %s164, %s165
      %p169 = pneg %p163
      %p170 = scmp.eq.s32.totalorder %s21, 1
      %p171 = por %p169, %p170
      %p172 = scmp.ne.s32.totalorder %s164, %s167
      %p173 = scmp.eq.s32.totalorder %s21, 0
      %p174 = por %p172, %p173
      %p175 = scmp.ne.s32.totalorder %s164, %s167
      %p176 = scmp.eq.s32.totalorder %s26, 1
      %p177 = por %p175, %p176
      %p178 = scmp.ne.s32.totalorder %s167, %s168
      %p179 = scmp.eq.s32.totalorder %s26, 0
      %p180 = por %p178, %p179
      %p181 = scmp.ne.s32.totalorder %s167, %s168
      %p182 = scmp.eq.s32.totalorder %s27, 1
      %p183 = por %p181, %p182
      %p185 = scmp.ne.s32.totalorder %s168, %s184
      %p186 = scmp.eq.s32.totalorder %s27, 0
      %p187 = por %p185, %p186
      %s188 = ssub.s32 %s28, %s47
      %s189 = ssub.s32 %s29, %s43
      %s190 = sor.u32 %s188, %s189
      %p191 = scmp.eq.s32.totalorder %s190, 0
      %s193 = sadd.s32 %s192, 1
      %s194 = scalar_select %p191, %s192, %s193
      %p197 = pneg %p191
      %p198 = scmp.eq.s32.totalorder %s21, 1
      %p199 = por %p197, %p198
      %p200 = scmp.ne.s32.totalorder %s192, %s195
      %p201 = scmp.eq.s32.totalorder %s21, 0
      %p202 = por %p200, %p201
      %p203 = scmp.ne.s32.totalorder %s192, %s195
      %p204 = scmp.eq.s32.totalorder %s26, 1
      %p205 = por %p203, %p204
      %p206 = scmp.ne.s32.totalorder %s195, %s196
      %p207 = scmp.eq.s32.totalorder %s26, 0
      %p208 = por %p206, %p207
      %p209 = scmp.ne.s32.totalorder %s195, %s196
      %p210 = scmp.eq.s32.totalorder %s27, 1
      %p211 = por %p209, %p210
      %p213 = scmp.ne.s32.totalorder %s196, %s212
      %p214 = scmp.eq.s32.totalorder %s27, 0
      %p215 = por %p213, %p214
      %p216 = scmp.le.s32.totalorder 1, %s21
      %p217 = scmp.lt.s32.totalorder %s21, 3
      %p218 = pnand %p216, %p217
      %p219 = pneg %p218
      // Predicated region
      $region9: #{tpu_custom_call.1} parent=5 // pred_check
        _
      $region10: #{tpu_custom_call.1} parent=5 // pred_check_branch
        %221 = sbr.rel (%p218) target = $region12
      $region11: #{tpu_custom_call.1} parent=5 // pred_region
        %s222 = ssub.s32 %s21, 1
      $region12: #{tpu_custom_call.1} parent=5 // pred_fallthru
        _
      %p223 = scmp.lt.s32.totalorder %s21, 2
      // Predicated region
      $region13: #{tpu_custom_call.1} parent=5 // pred_check
        %p224 = pneg %p223
      $region14: #{tpu_custom_call.1} parent=5 // pred_check_branch
        %226 = sbr.rel (%p224) target = $region16
      $region15: #{tpu_custom_call.1} parent=5 // pred_region
        // Predicated region
        $region17: #{tpu_custom_call.1} parent=15 // pred_check
          %p227 = pneg %p62
        $region18: #{tpu_custom_call.1} parent=15 // pred_check_branch
          %229 = sbr.rel (%p227) target = $region20
        $region19: #{tpu_custom_call.1} parent=15 // pred_region
          %s230 = sand.u32 %s52, 1
          %s231 = scalar_lea.sflag [#allocation6], %s230
          %s232 = sand.u32 %s52, 1
          %s233 = smul.addr %s232, 8
          %s234 = scalar_lea.vmem [#allocation5], %s233
          %s235 = smul.u32 2, %s29
          %237 = vsyncadd %s231, 0
          %s238 = smul.addr %s28, 2
          %s239 = sadd.s32 %s235, %s238
          %s240 = smul.addr %s239, 4
          %s241 = scalar_lea.hbm %s0, %s240
          %s242 = sshll.u32 %s241, 4
          %s243 = int_to_ptr.hbm [resolvable:$true] %s242
          %s244 = sshll.u32 %s234, 4
          %s245 = int_to_ptr.vmem [resolvable:$true] %s244
          %250 = dma.hbm_to_vmem [thread:$0]  %s243, 128, %s245, %s231, 64, 64, 4
        $region20: #{tpu_custom_call.1} parent=15 // pred_fallthru
          _
        // Predicated region
        $region21: #{tpu_custom_call.1} parent=15 // pred_check
          %p251 = pneg %p90
        $region22: #{tpu_custom_call.1} parent=15 // pred_check_branch
          %253 = sbr.rel (%p251) target = $region24
        $region23: #{tpu_custom_call.1} parent=15 // pred_region
          %s254 = sand.u32 %s21, 1
          %s255 = scalar_lea.sflag [#allocation9], %s254
          %s256 = sand.u32 %s80, 1
          %s257 = smul.addr %s256, 64
          %s258 = scalar_lea.vmem [#allocation8], %s257
          %s259 = smul.u32 16, %s30
          %261 = vsyncadd %s255, 0
          %s262 = smul.addr %s28, 16
          %s263 = sadd.s32 %s259, %s262
          %s264 = smul.addr %s263, 4
          %s265 = scalar_lea.hbm %s1, %s264
          %s266 = sshll.u32 %s265, 4
          %s267 = int_to_ptr.hbm [resolvable:$true] %s266
          %s268 = sshll.u32 %s258, 4
          %s269 = int_to_ptr.vmem [resolvable:$true] %s268
          %274 = dma.hbm_to_vmem [thread:$0]  %s267, 1024, %s269, %s255, 64, 64, 4
        $region24: #{tpu_custom_call.1} parent=15 // pred_fallthru
          _
        // Predicated region
        $region25: #{tpu_custom_call.1} parent=15 // pred_check
          %p275 = pneg %p118
        $region26: #{tpu_custom_call.1} parent=15 // pred_check_branch
          %277 = sbr.rel (%p275) target = $region28
        $region27: #{tpu_custom_call.1} parent=15 // pred_region
          %s278 = sand.u32 %s21, 1
          %s279 = scalar_lea.sflag [#allocation9], %s278
          %s280 = sand.u32 %s108, 1
          %s281 = smul.addr %s280, 64
          %s282 = scalar_lea.vmem [#allocation10], %s281
          %s283 = smul.u32 16, %s30
          %285 = vsyncadd %s279, 0
          %s286 = smul.addr %s28, 16
          %s287 = sadd.s32 %s283, %s286
          %s288 = smul.addr %s287, 4
          %s289 = scalar_lea.hbm %s2, %s288
          %s290 = sshll.u32 %s289, 4
          %s291 = int_to_ptr.hbm [resolvable:$true] %s290
          %s292 = sshll.u32 %s282, 4
          %s293 = int_to_ptr.vmem [resolvable:$true] %s292
          %298 = dma.hbm_to_vmem [thread:$0]  %s291, 1024, %s293, %s279, 64, 64, 4
        $region28: #{tpu_custom_call.1} parent=15 // pred_fallthru
          _
        // Predicated region
        $region29: #{tpu_custom_call.1} parent=15 // pred_check
          %p299 = pneg %p146
        $region30: #{tpu_custom_call.1} parent=15 // pred_check_branch
          %301 = sbr.rel (%p299) target = $region32
        $region31: #{tpu_custom_call.1} parent=15 // pred_region
          %p302 = scmp.lt.s32.totalorder %s28, 1
          %s303 = scalar_select %p302, %s28, 1
          %p304 = scmp.lt.s32.totalorder %s30, 0
          %s305 = scalar_select %p304, %s30, 0
          %s306 = sadd.s32 %s305, %s303
          %s307 = scalar_lea.vmem %s3, %s306
        $region32: #{tpu_custom_call.1} parent=15 // pred_fallthru
          _
      $region16: #{tpu_custom_call.1} parent=5 // pred_fallthru
        _
      %p308 = scmp.le.s32.totalorder 1, %s21
      %p309 = scmp.lt.s32.totalorder %s21, 3
      %p310 = pnand %p308, %p309
      %p311 = pneg %p310
      // Predicated region
      $region33: #{tpu_custom_call.1} parent=5 // pred_check
        _
      $region34: #{tpu_custom_call.1} parent=5 // pred_check_branch
        %313 = sbr.rel (%p310) target = $region36
      $region35: #{tpu_custom_call.1} parent=5 // pred_region
        %s314 = ssub.s32 %s21, 1
        %s315 = sand.u32 %s55, 1
        %s316 = scalar_lea.sflag [#allocation6], %s315
        %s317 = sand.u32 %s55, 1
        %s318 = smul.addr %s317, 8
        %s319 = scalar_lea.vmem [#allocation5], %s318
        // Predicated region
        $region37: #{tpu_custom_call.1} parent=35 // pred_check
          %p320 = pneg %p68
        $region38: #{tpu_custom_call.1} parent=35 // pred_check_branch
          %322 = sbr.rel (%p320) target = $region40
        $region39: #{tpu_custom_call.1} parent=35 // pred_region
          %324 = dma.done %s316, 128
        $region40: #{tpu_custom_call.1} parent=35 // pred_fallthru
          _
        %s325 = sand.u32 %s26, 1
        %s326 = scalar_lea.sflag [#allocation9], %s325
        %s327 = sand.u32 %s83, 1
        %s328 = smul.addr %s327, 64
        %s329 = scalar_lea.vmem [#allocation8], %s328
        // Predicated region
        $region41: #{tpu_custom_call.1} parent=35 // pred_check
          %p330 = pneg %p96
        $region42: #{tpu_custom_call.1} parent=35 // pred_check_branch
          %332 = sbr.rel (%p330) target = $region44
        $region43: #{tpu_custom_call.1} parent=35 // pred_region
          %334 = dma.done %s326, 1024
        $region44: #{tpu_custom_call.1} parent=35 // pred_fallthru
          _
        %s335 = sand.u32 %s26, 1
        %s336 = scalar_lea.sflag [#allocation9], %s335
        %s337 = sand.u32 %s111, 1
        %s338 = smul.addr %s337, 64
        %s339 = scalar_lea.vmem [#allocation10], %s338
        // Predicated region
        $region45: #{tpu_custom_call.1} parent=35 // pred_check
          %p340 = pneg %p124
        $region46: #{tpu_custom_call.1} parent=35 // pred_check_branch
          %342 = sbr.rel (%p340) target = $region48
        $region47: #{tpu_custom_call.1} parent=35 // pred_region
          %344 = dma.done %s336, 1024
        $region48: #{tpu_custom_call.1} parent=35 // pred_fallthru
          _
        %s345 = sand.u32 %s55, 1
        %s346 = scalar_lea.sflag [#allocation6], %s345
        %s347 = sand.u32 %s55, 1
        %s348 = smul.addr %s347, 8
        %s349 = scalar_lea.vmem [#allocation5], %s348
        %p350 = pneg %p68
        %p351 = pneg %p65
        %s352 = sand.u32 %s26, 1
        %s353 = scalar_lea.sflag [#allocation9], %s352
        %s354 = sand.u32 %s83, 1
        %s355 = smul.addr %s354, 64
        %s356 = scalar_lea.vmem [#allocation8], %s355
        %p357 = pneg %p96
        %p358 = pneg %p93
        %s359 = sand.u32 %s26, 1
        %s360 = scalar_lea.sflag [#allocation9], %s359
        %s361 = sand.u32 %s111, 1
        %s362 = smul.addr %s361, 64
        %s363 = scalar_lea.vmem [#allocation10], %s362
        %p364 = pneg %p124
        %p365 = pneg %p121
        %p366 = scmp.lt.s32.totalorder %s31, 1
        %s367 = scalar_select %p366, %s31, 1
        %p368 = scmp.lt.s32.totalorder %s33, 0
        %s369 = scalar_select %p368, %s33, 0
        %s370 = sadd.s32 %s369, %s367
        %s371 = scalar_lea.vmem %s3, %s370
        %p372 = pneg %p152
        %p373 = pneg %p149
        %p374 = pneg %p180
        %p375 = pneg %p177
        %s376 = sand.u32 %s167, 1
        %s377 = scalar_lea.sflag [#allocation7], %s376
        %s378 = sand.u32 %s167, 1
        %s379 = smul.addr %s378, 16
        %s380 = scalar_lea.vmem [#allocation11], %s379
        %p381 = pneg %p208
        %p382 = pneg %p205
        %s383 = smul.u32 2, %s32
        %p384 = scmp.lt.s32.totalorder %s31, 1
        %s385 = scalar_select %p384, %s31, 1
        %p386 = scmp.lt.s32.totalorder %s383, 1
        %s387 = scalar_select %p386, %s383, 1
        %s388 = smul.addr %s385, 2
        %s389 = sadd.s32 %s387, %s388
        %s390 = smul.addr %s389, 8
        %s391 = scalar_lea.vmem %s5, %s390
        %s392 = smul.u32 2, %s32
        %s393 = smul.u32 16, %s33
        %s394 = smul.u32 16, %s33
        %p395 = scmp.lt.s32.totalorder %s31, 1
        %s396 = scalar_select %p395, %s31, 1
        %p397 = scmp.lt.s32.totalorder %s33, 0
        %s398 = scalar_select %p397, %s33, 0
        %s399 = sadd.s32 %s398, %s396
        %s400 = scalar_lea.vmem %s3, %s399
        %s401 = smul.u32 2, %s32
        %s402 = smul.u32 2, %s32
        %p403 = scmp.lt.s32.totalorder %s31, 1
        %s404 = scalar_select %p403, %s31, 1
        %p405 = scmp.lt.s32.totalorder %s402, 1
        %s406 = scalar_select %p405, %s402, 1
        %s407 = smul.addr %s404, 2
        %s408 = sadd.s32 %s406, %s407
        %s409 = smul.addr %s408, 8
        %s410 = scalar_lea.vmem %s5, %s409
        %s411 = smul.u32 2, %s32
        %p412 = scmp.eq.s32.totalorder %s33, 0
        // Predicated region
        $region49: #{tpu_custom_call.1} parent=35 // pred_check
          %p413 = pneg %p412
        $region50: #{tpu_custom_call.1} parent=35 // pred_check_branch
          %415 = sbr.rel (%p413) target = $region52
        $region51: #{tpu_custom_call.1} parent=35 // pred_region
          %vm416 = vcmask 7168
          %417 = vst.msk [vmem:[#allocation2] sm:$0xff] %vm416, -1e+30
          %418 = vst.msk [vmem:[#allocation2 + $0x8] sm:$0xff] %vm416, -1e+30
          %419 = vst.msk [vmem:[#allocation3] sm:$0xff] %vm416, 0.0
          %420 = vst.msk [vmem:[#allocation3 + $0x8] sm:$0xff] %vm416, 0.0
          %421 = vst [vmem:[#allocation4] sm:$0xff] 0.0
          %422 = vst [vmem:[#allocation4 + $0x8] sm:$0xff] 0.0
        $region52: #{tpu_custom_call.1} parent=35 // pred_fallthru
          _
        %v423 = vld [vmem:[%s319] sm:$0xf]
        %v424 = vld [vmem:[%s319 + $0x4] sm:$0xf]
        %v425 = vld [vmem:[%s329] sm:$0xf]
        %v426 = vld [vmem:[%s329 + $0x4] sm:$0xf]
        %v427 = vld [vmem:[%s329 + $0x8] sm:$0xf]
        %v428 = vld [vmem:[%s329 + $0xc] sm:$0xf]
        %v429 = vld [vmem:[%s329 + $0x10] sm:$0xf]
        %v430 = vld [vmem:[%s329 + $0x14] sm:$0xf]
        %v431 = vld [vmem:[%s329 + $0x18] sm:$0xf]
        %v432 = vld [vmem:[%s329 + $0x1c] sm:$0xf]
        %v433 = vld [vmem:[%s329 + $0x20] sm:$0xf]
        %v434 = vld [vmem:[%s329 + $0x24] sm:$0xf]
        %v435 = vld [vmem:[%s329 + $0x28] sm:$0xf]
        %v436 = vld [vmem:[%s329 + $0x2c] sm:$0xf]
        %v437 = vld [vmem:[%s329 + $0x30] sm:$0xf]
        %v438 = vld [vmem:[%s329 + $0x34] sm:$0xf]
        %v439 = vld [vmem:[%s329 + $0x38] sm:$0xf]
        %v440 = vld [vmem:[%s329 + $0x3c] sm:$0xf]
        %v441 = vld [vmem:[%s400] sm:$0x1]
        %v443 = vperm.slane %v441, 0
        %v447 = vunpack.c.l.b16 %v423
        %v448 = vunpack.c.l.b16 %v424
        %v449 = vpack.c.b16 %v448, %v447
        %v467 = vunpack.c.l.b16 %v425
        %v468 = vunpack.c.l.b16 %v426
        %v469 = vunpack.c.l.b16 %v427
        %v470 = vunpack.c.l.b16 %v428
        %v471 = vunpack.c.l.b16 %v429
        %v472 = vunpack.c.l.b16 %v430
        %v473 = vunpack.c.l.b16 %v431
        %v474 = vunpack.c.l.b16 %v432
        %v475 = vunpack.c.l.b16 %v433
        %v476 = vunpack.c.l.b16 %v434
        %v477 = vunpack.c.l.b16 %v435
        %v478 = vunpack.c.l.b16 %v436
        %v479 = vunpack.c.l.b16 %v437
        %v480 = vunpack.c.l.b16 %v438
        %v481 = vunpack.c.l.b16 %v439
        %v482 = vunpack.c.l.b16 %v440
        %v483 = vpack.c.b16 %v468, %v467
        %v484 = vpack.c.b16 %v470, %v469
        %v485 = vpack.c.b16 %v472, %v471
        %v486 = vpack.c.b16 %v474, %v473
        %v487 = vpack.c.b16 %v476, %v475
        %v488 = vpack.c.b16 %v478, %v477
        %v489 = vpack.c.b16 %v480, %v479
        %v490 = vpack.c.b16 %v482, %v481
        %499 = vmatpush.bf16.xpose.msra.mxu0 %v490
        %500 = vmatpush.bf16.xpose.msra.mxu0 %v489
        %501 = vmatpush.bf16.xpose.msra.mxu0 %v488
        %502 = vmatpush.bf16.xpose.msra.mxu0 %v487
        %503 = vmatpush.bf16.xpose.msra.mxu0 %v486
        %504 = vmatpush.bf16.xpose.msra.mxu0 %v485
        %505 = vmatpush.bf16.xpose.msra.mxu0 %v484
        %506 = vmatpush.bf16.xpose.msra.mxu0 %v483
        %507 = vmatmul.bf16.gmra.mxu0 %v449
        %v508 = vpop.f32.mrf.mxu0
        %v509 = vadd.f32 %v443, %v508
        %v510 = vpop.f32.mrf.mxu0
        %v511 = vadd.f32 %v443, %v510
        %512 = vdwg.mxu0
        %v513 = vld [vmem:[#allocation2] sm:$0xff]
        %v514 = vld [vmem:[#allocation2 + $0x8] sm:$0xff]
        %515 = vmax.xlane.f32.xlu0 %v509
        %v516 = vpop.xlane.xlu0 %515
        %517 = vmax.xlane.f32.xlu0 %v511
        %v518 = vpop.xlane.xlu0 %517
        %v519 = vmax.f32 %v513, %v516
        %v520 = vmax.f32 %v514, %v518
        %v521 = vsub.f32 %v513, %v519
        %v522 = vsub.f32 %v514, %v520
        %v523 = vmul.f32 %v521, 1.442695
        %v524 = vpow.pop %v523
        %v525 = vmul.f32 %v522, 1.442695
        %v526 = vpow.pop %v525
        %528 = vset.pattern.permute.xlu0 0
        %529 = vperm.xlu0 %528, %v519
        %v530 = vpop.permute.xlu0 %529
        %533 = vset.pattern.permute.xlu0 0
        %534 = vperm.xlu0 %533, %v520
        %v535 = vpop.permute.xlu0 %534
        %v537 = vsub.f32 %v509, %v530
        %v538 = vsub.f32 %v511, %v535
        %v539 = vmul.f32 %v537, 1.442695
        %v540 = vpow.pop %v539
        %v541 = vmul.f32 %v538, 1.442695
        %v542 = vpow.pop %v541
        %v543 = vld [vmem:[#allocation3] sm:$0xff]
        %v544 = vld [vmem:[#allocation3 + $0x8] sm:$0xff]
        %v545 = vmul.f32 %v524, %v543
        %v546 = vmul.f32 %v526, %v544
        %547 = vadd.xlane.f32.xlu0 %v540
        %v548 = vpop.xlane.xlu0 %547
        %549 = vadd.xlane.f32.xlu0 %v542
        %v550 = vpop.xlane.xlu0 %549
        %v551 = vadd.f32 %v545, %v548
        %v552 = vadd.f32 %v546, %v550
        %vm553 = vcmask 7168
        %554 = vst.msk [vmem:[#allocation3] sm:$0xff] %vm553, %v551
        %555 = vst.msk [vmem:[#allocation3 + $0x8] sm:$0xff] %vm553, %v552
        %v556 = vld [vmem:[#allocation4] sm:$0xff]
        %v557 = vld [vmem:[#allocation4 + $0x8] sm:$0xff]
        %559 = vset.pattern.permute.xlu0 0
        %560 = vperm.xlu0 %559, %v524
        %v561 = vpop.permute.xlu0 %560
        %564 = vset.pattern.permute.xlu0 0
        %565 = vperm.xlu0 %564, %v526
        %v566 = vpop.permute.xlu0 %565
        %v568 = vmul.f32 %v561, %v556
        %v569 = vmul.f32 %v566, %v557
        %v570 = vpack.c.bf16 %v542, %v540
        %v571 = vld [vmem:[%s339] sm:$0xf]
        %v572 = vld [vmem:[%s339 + $0x4] sm:$0xf]
        %v573 = vld [vmem:[%s339 + $0x8] sm:$0xf]
        %v574 = vld [vmem:[%s339 + $0xc] sm:$0xf]
        %v575 = vld [vmem:[%s339 + $0x10] sm:$0xf]
        %v576 = vld [vmem:[%s339 + $0x14] sm:$0xf]
        %v577 = vld [vmem:[%s339 + $0x18] sm:$0xf]
        %v578 = vld [vmem:[%s339 + $0x1c] sm:$0xf]
        %v579 = vld [vmem:[%s339 + $0x20] sm:$0xf]
        %v580 = vld [vmem:[%s339 + $0x24] sm:$0xf]
        %v581 = vld [vmem:[%s339 + $0x28] sm:$0xf]
        %v582 = vld [vmem:[%s339 + $0x2c] sm:$0xf]
        %v583 = vld [vmem:[%s339 + $0x30] sm:$0xf]
        %v584 = vld [vmem:[%s339 + $0x34] sm:$0xf]
        %v585 = vld [vmem:[%s339 + $0x38] sm:$0xf]
        %v586 = vld [vmem:[%s339 + $0x3c] sm:$0xf]
        %v603 = vunpack.c.l.b16 %v571
        %v604 = vunpack.c.l.b16 %v572
        %v605 = vunpack.c.l.b16 %v573
        %v606 = vunpack.c.l.b16 %v574
        %v607 = vunpack.c.l.b16 %v575
        %v608 = vunpack.c.l.b16 %v576
        %v609 = vunpack.c.l.b16 %v577
        %v610 = vunpack.c.l.b16 %v578
        %v611 = vunpack.c.l.b16 %v579
        %v612 = vunpack.c.l.b16 %v580
        %v613 = vunpack.c.l.b16 %v581
        %v614 = vunpack.c.l.b16 %v582
        %v615 = vunpack.c.l.b16 %v583
        %v616 = vunpack.c.l.b16 %v584
        %v617 = vunpack.c.l.b16 %v585
        %v618 = vunpack.c.l.b16 %v586
        %v619 = vpack.c.b16 %v604, %v603
        %v620 = vpack.c.b16 %v606, %v605
        %v621 = vpack.c.b16 %v608, %v607
        %v622 = vpack.c.b16 %v610, %v609
        %v623 = vpack.c.b16 %v612, %v611
        %v624 = vpack.c.b16 %v614, %v613
        %v625 = vpack.c.b16 %v616, %v615
        %v626 = vpack.c.b16 %v618, %v617
        %635 = vmatpush.bf16.msra.mxu0 %v626
        %636 = vmatpush.bf16.msra.mxu0 %v625
        %637 = vmatpush.bf16.msra.mxu0 %v624
        %638 = vmatpush.bf16.msra.mxu0 %v623
        %639 = vmatpush.bf16.msra.mxu0 %v622
        %640 = vmatpush.bf16.msra.mxu0 %v621
        %641 = vmatpush.bf16.msra.mxu0 %v620
        %642 = vmatpush.bf16.msra.mxu0 %v619
        %643 = vmatmul.bf16.gmra.mxu0 %v570
        %v644 = vpop.f32.mrf.mxu0
        %v645 = vadd.f32 0.0, %v644
        %v646 = vpop.f32.mrf.mxu0
        %v647 = vadd.f32 0.0, %v646
        %648 = vdwg.mxu0
        %v649 = vadd.f32 %v568, %v645
        %v650 = vadd.f32 %v569, %v647
        %651 = vst [vmem:[#allocation4] sm:$0xff] %v649
        %652 = vst [vmem:[#allocation4 + $0x8] sm:$0xff] %v650
        %653 = vst.msk [vmem:[#allocation2] sm:$0xff] %vm553, %v519
        %654 = vst.msk [vmem:[#allocation2 + $0x8] sm:$0xff] %vm553, %v520
        // Predicated region
        $region53: #{tpu_custom_call.1} parent=35 // pred_check
          %p655 = pneg %p412
        $region54: #{tpu_custom_call.1} parent=35 // pred_check_branch
          %657 = sbr.rel (%p655) target = $region56
        $region55: #{tpu_custom_call.1} parent=35 // pred_region
          %v658 = vld [vmem:[#allocation3] sm:$0xff]
          %v659 = vld [vmem:[#allocation3 + $0x8] sm:$0xff]
          %v660 = vrcp.pop %v658
          %v661 = vrcp.pop %v659
          %v662 = vmul.f32 %v658, %v660
          %v663 = vmul.f32 %v659, %v661
          %v664 = vsub.f32 2.0, %v662
          %v665 = vsub.f32 2.0, %v663
          %v666 = vmul.f32 %v660, %v664
          %v667 = vmul.f32 %v661, %v665
          %v668 = vld [vmem:[#allocation4] sm:$0xff]
          %v669 = vld [vmem:[#allocation4 + $0x8] sm:$0xff]
          %671 = vset.pattern.permute.xlu0 0
          %672 = vperm.xlu0 %671, %v666
          %v673 = vpop.permute.xlu0 %672
          %676 = vset.pattern.permute.xlu0 0
          %677 = vperm.xlu0 %676, %v667
          %v678 = vpop.permute.xlu0 %677
          %v680 = vmul.f32 %v668, %v673
          %v681 = vmul.f32 %v669, %v678
          %682 = vst [vmem:[%s380] sm:$0xff] %v680
          %683 = vst [vmem:[%s380 + $0x8] sm:$0xff] %v681
          %v684 = vld [vmem:[#allocation2] sm:$0xff]
          %v685 = vld [vmem:[#allocation2 + $0x8] sm:$0xff]
          %v686 = vlog2.pop %v658
          %v687 = vmul.f32 %v686, 0.6931472
          %v688 = vlog2.pop %v659
          %v689 = vmul.f32 %v688, 0.6931472
          %v690 = vadd.f32 %v684, %v687
          %v691 = vadd.f32 %v685, %v689
          %692 = vst.msk [vmem:[%s410] sm:$0xff] %vm553, %v690
          %693 = vst.msk [vmem:[%s410 + $0x8] sm:$0xff] %vm553, %v691
        $region56: #{tpu_custom_call.1} parent=35 // pred_fallthru
          _
        %s694 = sand.u32 %s167, 1
        %s695 = scalar_lea.sflag [#allocation7], %s694
        %s696 = sand.u32 %s167, 1
        %s697 = smul.addr %s696, 16
        %s698 = scalar_lea.vmem [#allocation11], %s697
        %s699 = smul.u32 2, %s32
        %p700 = scmp.lt.s32.totalorder %s31, 1
        %s701 = scalar_select %p700, %s31, 1
        %p702 = scmp.lt.s32.totalorder %s699, 1
        %s703 = scalar_select %p702, %s699, 1
        %s704 = smul.addr %s701, 2
        %s705 = sadd.s32 %s703, %s704
        %s706 = smul.addr %s705, 8
        %s707 = scalar_lea.vmem %s5, %s706
        // Predicated region
        $region57: #{tpu_custom_call.1} parent=35 // pred_check
          %p708 = pneg %p177
        $region58: #{tpu_custom_call.1} parent=35 // pred_check_branch
          %710 = sbr.rel (%p708) target = $region60
        $region59: #{tpu_custom_call.1} parent=35 // pred_region
          %s711 = smul.u32 2, %s32
          %713 = vsyncadd %s695, 0
          %s714 = smul.addr %s31, 2
          %s715 = sadd.s32 %s711, %s714
          %s716 = smul.addr %s715, 8
          %s717 = scalar_lea.hbm %s4, %s716
          %s718 = sshll.u32 %s698, 4
          %s719 = int_to_ptr.vmem [resolvable:$true] %s718
          %s720 = sshll.u32 %s717, 4
          %s721 = int_to_ptr.hbm [resolvable:$true] %s720
          %726 = dma.vmem_to_hbm [thread:$0]  %s719, 256, %s721, %s695, 128, 128, 8
        $region60: #{tpu_custom_call.1} parent=35 // pred_fallthru
          _
        // Predicated region
        $region61: #{tpu_custom_call.1} parent=35 // pred_check
          %p727 = pneg %p205
        $region62: #{tpu_custom_call.1} parent=35 // pred_check_branch
          %729 = sbr.rel (%p727) target = $region64
        $region63: #{tpu_custom_call.1} parent=35 // pred_region
          %s730 = smul.u32 2, %s32
        $region64: #{tpu_custom_call.1} parent=35 // pred_fallthru
          _
      $region36: #{tpu_custom_call.1} parent=5 // pred_fallthru
        _
      %p731 = scmp.le.s32.totalorder 2, %s21
      // Predicated region
      $region65: #{tpu_custom_call.1} parent=5 // pred_check
        %p732 = pneg %p731
      $region66: #{tpu_custom_call.1} parent=5 // pred_check_branch
        %734 = sbr.rel (%p732) target = $region68
      $region67: #{tpu_custom_call.1} parent=5 // pred_region
        %s735 = ssub.s32 %s21, 2
        // Predicated region
        $region69: #{tpu_custom_call.1} parent=67 // pred_check
          %p736 = pneg %p183
        $region70: #{tpu_custom_call.1} parent=67 // pred_check_branch
          %738 = sbr.rel (%p736) target = $region72
        $region71: #{tpu_custom_call.1} parent=67 // pred_region
          %s739 = sand.u32 %s168, 1
          %s740 = scalar_lea.sflag [#allocation7], %s739
          %s741 = sand.u32 %s168, 1
          %s742 = smul.addr %s741, 16
          %s743 = scalar_lea.vmem [#allocation11], %s742
          %745 = dma.done %s740, 256
        $region72: #{tpu_custom_call.1} parent=67 // pred_fallthru
          _
        // Predicated region
        $region73: #{tpu_custom_call.1} parent=67 // pred_check
          %p746 = pneg %p211
        $region74: #{tpu_custom_call.1} parent=67 // pred_check_branch
          %748 = sbr.rel (%p746) target = $region76
        $region75: #{tpu_custom_call.1} parent=67 // pred_region
          %s749 = smul.u32 2, %s35
          %p750 = scmp.lt.s32.totalorder %s34, 1
          %s751 = scalar_select %p750, %s34, 1
          %p752 = scmp.lt.s32.totalorder %s749, 1
          %s753 = scalar_select %p752, %s749, 1
          %s754 = smul.addr %s751, 2
          %s755 = sadd.s32 %s753, %s754
          %s756 = smul.addr %s755, 8
          %s757 = scalar_lea.vmem %s5, %s756
        $region76: #{tpu_custom_call.1} parent=67 // pred_fallthru
          _
      $region68: #{tpu_custom_call.1} parent=5 // pred_fallthru
        _
    $region6: #{tpu_custom_call.1} parent=1 // loop_footer
      %s25 = sadd.s32 1, %s21
    $region7: #{tpu_custom_call.1} parent=1 // loop_footer_branch
      %20 = sbr.rel target = $region3
    $region8: #{tpu_custom_call.1} parent=1 // loop_exit
      _
    %758 = vsyncpa [#allocation6], 1
    %s759 = scalar_lea.sflag [#allocation6], 1
    %760 = vsyncpa %s759, 1
    %761 = vsyncpa [#allocation9], 1
    %s762 = scalar_lea.sflag [#allocation9], 1
    %763 = vsyncpa %s762, 1
    %764 = vsyncpa [#allocation7], 1
    %s765 = scalar_lea.sflag [#allocation7], 1
    %766 = vsyncpa %s765, 1

</llo_original>
